<compile_context>
chip_gen: v6e
topology: v6e:2x2x1
jax: 0.10.0
libtpu: 0.0.40
codegen_flags: <defaults>
</compile_context>

<pallas_src>
import functools

import jax
import jax.numpy as jnp
from jax.experimental import pallas as pl
from jax.experimental.pallas import tpu as pltpu


def _round_up(x, m):
    return (x + m - 1) // m * m


# ----------------------------------------------------------------------------
# Kernel
# ----------------------------------------------------------------------------
def _mlp_kernel(*refs, relu_flags, compute_dtype):
    """refs = (x_ref, w0, b0, ..., w_{H-2}, b_{H-2}, w_fused_row, b_fused, out_ref).

    Hidden Linears run on the MXU with f32 accumulation; bias + ReLU on the
    VPU in f32.  The fused (last hidden o output) affine map is a VPU multiply
    + lane reduction, stored lane-dense as a (1, batch_tile) row.
    """
    x_ref = refs[0]
    out_ref = refs[-1]
    params = refs[1:-1]
    n_hidden_matmuls = len(relu_flags)

    h = x_ref[...]                                   # (T, n_in), compute_dtype
    for i in range(n_hidden_matmuls):
        w = params[2 * i][...]                       # (in, out), compute_dtype
        b = params[2 * i + 1][...]                   # (1, out),  f32
        h = jnp.dot(h.astype(compute_dtype), w,
                    preferred_element_type=jnp.float32) + b
        if relu_flags[i]:
            h = jnp.maximum(h, 0.0)

    # Fused final affine map (d -> 1): VPU mul + XLU lane reduce, f32.
    w_row = params[-2][...]                          # (1, d), f32
    b_out = params[-1][...]                          # (1, 1), f32
    row = jnp.sum(h.astype(jnp.float32) * w_row, axis=-1)      # (T,)
    out_ref[...] = (row[None, :] + b_out).astype(out_ref.dtype)


# ----------------------------------------------------------------------------
# One-time parameter preprocessing (hoisted out of the forward call path)
# ----------------------------------------------------------------------------
def prepare_nn1_params(params, relu_flags, compute_dtype=jnp.float32):
    """Fuse the last two (activation-free) linears, cast/transpose once.

    Call this ONCE and reuse the result across forward calls; it removes a
    full HBM read+write of every weight from each call.
    """
    assert len(params) >= 2
    assert params[-1][0].shape[1] == 1, "last layer must have 1 output"
    assert not relu_flags[-1] and not relu_flags[-2], (
        "fusion requires no activation between the last two linears")

    f32 = jnp.float32
    w_h, b_h = params[-2]
    w_o, b_o = params[-1]
    w_fused = jnp.asarray(w_h, f32) @ jnp.asarray(w_o, f32)          # (d, 1)
    b_fused = jnp.asarray(b_h, f32) @ jnp.asarray(w_o, f32) + jnp.asarray(b_o, f32)

    flat, kept_relu = [], []
    for (w, b), f in zip(params[:-2], relu_flags[:-2]):
        flat.append(jnp.asarray(w, compute_dtype))   # MXU operand
        flat.append(jnp.asarray(b, f32))             # bias stays f32
        kept_relu.append(bool(f))
    flat.append(w_fused.T.astype(f32))               # (1, d) lane-dense row
    flat.append(b_fused.astype(f32))                 # (1, 1)

    flat = [jax.block_until_ready(a) for a in flat]
    return dict(flat=tuple(flat), relu_flags=tuple(kept_relu),
                compute_dtype=compute_dtype, n_in=int(params[0][0].shape[0]))


# ----------------------------------------------------------------------------
# Tiling / VMEM heuristics
# ----------------------------------------------------------------------------
def _choose_batch_tile(batch):
    """Full batch when small; else 128-aligned tiles, >= 2 tiles (v7x megacore),
    minimal padding, capped at 512 rows."""
    if batch <= 128:
        return max(8, _round_up(batch, 8))
    best = None
    for tile in (128, 256, 384, 512):
        padded = _round_up(batch, tile)
        if padded // tile < 2:
            continue
        key = (padded, -tile)                 # least padding, then largest tile
        if best is None or key < best[0]:
            best = (key, tile)
    return best[1] if best else 128


def _vmem_limit_bytes(batch_tile, n_in, flat, compute_dtype, weight_bufs):
    comp = jnp.dtype(compute_dtype).itemsize
    widths = [n_in] + [int(w.shape[1]) for w in flat[:-2:2]]
    x_tile = 2 * batch_tile * n_in * comp                      # double-buffered input
    out_tile = 2 * batch_tile * 4                              # double-buffered (1,T) f32
    weights = weight_bufs * sum(int(a.size) * jnp.dtype(a.dtype).itemsize
                                for a in flat)
    interm = 3 * batch_tile * max(widths) * 4                  # live h / cast copies
    est = x_tile + out_tile + weights + interm
    # Generous headroom; stay at or below v7x's 64 MiB physical VMEM.
    return int(min(max(2 * est + (2 << 20), 16 << 20), 64 << 20))


# ----------------------------------------------------------------------------
# Forward
# ----------------------------------------------------------------------------
_SINGLE_BUFFER_WEIGHTS = None   # probed on first call: pl.Buffered(1) support


def _weight_spec(shape, single_buffer):
    if single_buffer:
        return pl.BlockSpec(shape, lambda i: (0, 0), pipeline_mode=pl.Buffered(1))
    return pl.BlockSpec(shape, lambda i: (0, 0))


def _forward_impl(x, flat, relu_flags, compute_dtype, batch_tile, padded,
                  single_buffer):
    n_in = x.shape[1]
    in_specs = [pl.BlockSpec((batch_tile, n_in), lambda i: (i, 0))]
    for arr in flat:
        in_specs.append(_weight_spec(arr.shape, single_buffer))
    out_specs = pl.BlockSpec((1, batch_tile), lambda i: (0, i))

    kernel = functools.partial(_mlp_kernel, relu_flags=relu_flags,
                               compute_dtype=compute_dtype)
    vmem_limit = _vmem_limit_bytes(batch_tile, n_in, flat, compute_dtype,
                                   weight_bufs=1 if single_buffer else 2)
    return pl.pallas_call(
        kernel,
        out_shape=jax.ShapeDtypeStruct((1, padded), jnp.float32),
        grid_spec=pltpu.PrefetchScalarGridSpec(
            num_scalar_prefetch=0,
            grid=(padded // batch_tile,),
            in_specs=in_specs,
            out_specs=out_specs,
        ),
        compiler_params=pltpu.CompilerParams(
            dimension_semantics=("parallel",),
            vmem_limit_bytes=vmem_limit,
        ),
    )(x, *flat)


def mlp_forward(x, prepared, *, batch_tile=None):
    """NN1 forward pass. x: (batch, n_in) f32 -> (batch, 1) f32."""
    global _SINGLE_BUFFER_WEIGHTS
    flat = prepared["flat"]
    relu_flags = prepared["relu_flags"]
    compute_dtype = prepared["compute_dtype"]

    batch, n_in = x.shape
    assert n_in == prepared["n_in"]

    if batch_tile is None:
        batch_tile = _choose_batch_tile(batch)
    batch_tile = max(8, _round_up(batch_tile, 8))
    if batch_tile < batch:
        # Multiple tiles: keep the lane-dense (1, T) output block 128-aligned.
        batch_tile = _round_up(batch_tile, 128)

    padded = _round_up(batch, batch_tile)
    if padded != batch:
        x = jnp.pad(x, ((0, padded - batch), (0, 0)))
    x = x.astype(compute_dtype)

    if _SINGLE_BUFFER_WEIGHTS is None:
        try:
            out_row = jax.block_until_ready(
                _forward_impl(x, flat, relu_flags, compute_dtype,
                              batch_tile, padded, single_buffer=True))
            _SINGLE_BUFFER_WEIGHTS = True
        except Exception:
            # pl.Buffered(1) not supported on this jax/libtpu: fall back to
            # default double-buffered weight blocks.
            _SINGLE_BUFFER_WEIGHTS = False
            out_row = _forward_impl(x, flat, relu_flags, compute_dtype,
                                    batch_tile, padded, single_buffer=False)
    else:
        out_row = _forward_impl(x, flat, relu_flags, compute_dtype,
                                batch_tile, padded,
                                single_buffer=_SINGLE_BUFFER_WEIGHTS)

    return out_row.T[:batch]                           # (batch, 1)


# ----------------------------------------------------------------------------
# Parameter init matching NN1's layer shapes + pure-JAX reference
# ----------------------------------------------------------------------------
def init_nn1_params(key, n_in, n_hidden, hidden_layers):
    dims_in = [n_in] + [n_hidden] * hidden_layers
    dims_out = [n_hidden] * hidden_layers + [1]
    # ReLU after every hidden linear except the last; none after the output
    # (matches `self.layers[:-1]` dropping the trailing ReLU).
    relu_flags = [True] * (hidden_layers - 1) + [False, False]

    params = []
    for d_in, d_out in zip(dims_in, dims_out):
        key, kw, kb = jax.random.split(key, 3)
        bound = 1.0 / jnp.sqrt(jnp.float32(d_in))
        w = jax.random.uniform(kw, (d_in, d_out), jnp.float32, -bound, bound)
        b = jax.random.uniform(kb, (1, d_out), jnp.float32, -bound, bound)
        params.append((w, b))
    return params, relu_flags


def mlp_reference(x, params, relu_flags):
    h = x
    for (w, b), f in zip(params, relu_flags):
        h = h @ w + b
        if f:
            h = jnp.maximum(h, 0.0)
    return h


if __name__ == "__main__":
    batch, n_in, n_hidden, hidden_layers = 16, 32, 32, 3
    key = jax.random.PRNGKey(0)
    key, kx = jax.random.split(key)
    x = jax.random.normal(kx, (batch, n_in), jnp.float32)

    params, relu_flags = init_nn1_params(key, n_in, n_hidden, hidden_layers)
    ref = mlp_reference(x, params, relu_flags)

    # f32 compute path (tolerance accounts for last-two-linear fusion
    # reassociation and the MXU's default f32 precision).
    prep_f32 = prepare_nn1_params(params, relu_flags, compute_dtype=jnp.float32)
    out = jax.block_until_ready(mlp_forward(x, prep_f32))
    assert out.shape == (batch, 1), out.shape
    assert jnp.allclose(out, ref, atol=1e-4, rtol=1e-4), (
        float(jnp.max(jnp.abs(out - ref))))

    # bf16 matmul operands with f32 accumulation: loose relative tolerance.
    prep_bf16 = prepare_nn1_params(params, relu_flags, compute_dtype=jnp.bfloat16)
    out_bf16 = jax.block_until_ready(mlp_forward(x, prep_bf16))
    rel_err = float(jnp.max(jnp.abs(out_bf16 - ref))
                    / (jnp.max(jnp.abs(ref)) + 1e-6))
    assert rel_err < 0.1, rel_err

    # Multi-tile path: padding, 128-aligned tiles, grid >= 2 (megacore-shardable).
    batch2 = 300
    key, kx2 = jax.random.split(key)
    x2 = jax.random.normal(kx2, (batch2, n_in), jnp.float32)
    ref2 = mlp_reference(x2, params, relu_flags)
    out2 = jax.block_until_ready(mlp_forward(x2, prep_f32))
    assert out2.shape == (batch2, 1), out2.shape
    assert jnp.allclose(out2, ref2, atol=1e-4, rtol=1e-4), (
        float(jnp.max(jnp.abs(out2 - ref2))))

    # hidden_layers == 1: the whole net fuses into a single affine map
    # (zero MXU matmuls inside the kernel).
    params1, relu_flags1 = init_nn1_params(jax.random.PRNGKey(1), n_in, n_hidden, 1)
    prep1 = prepare_nn1_params(params1, relu_flags1)
    ref1 = mlp_reference(x, params1, relu_flags1)
    out1 = jax.block_until_ready(mlp_forward(x, prep1))
    assert jnp.allclose(out1, ref1, atol=1e-4, rtol=1e-4), (
        float(jnp.max(jnp.abs(out1 - ref1))))

    print("KERNEL_OK")
</pallas_src>

<mosaic_0001>
module attributes {stable_mosaic.version = 11 : i64} {
  func.func @_mlp_kernel(%arg0: i32, %arg1: memref<16x32xf32, #tpu.memory_space<vmem>>, %arg2: memref<32x32xf32, #tpu.memory_space<vmem>>, %arg3: memref<1x32xf32, #tpu.memory_space<vmem>>, %arg4: memref<32x32xf32, #tpu.memory_space<vmem>>, %arg5: memref<1x32xf32, #tpu.memory_space<vmem>>, %arg6: memref<1x32xf32, #tpu.memory_space<vmem>>, %arg7: memref<1x1xf32, #tpu.memory_space<vmem>>, %arg8: memref<1x16xf32, #tpu.memory_space<vmem>>) attributes {dimension_semantics = [#tpu.dimension_semantics<parallel>], iteration_bounds = array<i64: 1>, scalar_prefetch = 0 : i64, scratch_operands = 0 : i64, tpu.core_type = #tpu.core_type<tc>, window_params = [{transform_indices = @transform_0, window_bounds = array<i64: 16, 32>}, {pipeline_mode = #tpu.pipeline_mode<synchronous>, transform_indices = @transform_1, window_bounds = array<i64: 32, 32>}, {pipeline_mode = #tpu.pipeline_mode<synchronous>, transform_indices = @transform_2, window_bounds = array<i64: 1, 32>}, {pipeline_mode = #tpu.pipeline_mode<synchronous>, transform_indices = @transform_3, window_bounds = array<i64: 32, 32>}, {pipeline_mode = #tpu.pipeline_mode<synchronous>, transform_indices = @transform_4, window_bounds = array<i64: 1, 32>}, {pipeline_mode = #tpu.pipeline_mode<synchronous>, transform_indices = @transform_5, window_bounds = array<i64: 1, 32>}, {pipeline_mode = #tpu.pipeline_mode<synchronous>, transform_indices = @transform_6, window_bounds = array<i64: 1, 1>}, {transform_indices = @transform_7, window_bounds = array<i64: 1, 16>}]} {
    %c0 = arith.constant 0 : index
    %c0_0 = arith.constant 0 : index
    %0 = vector.load %arg1[%c0, %c0_0] : memref<16x32xf32, #tpu.memory_space<vmem>>, vector<16x32xf32>
    %c0_1 = arith.constant 0 : index
    %c0_2 = arith.constant 0 : index
    %1 = vector.load %arg2[%c0_1, %c0_2] : memref<32x32xf32, #tpu.memory_space<vmem>>, vector<32x32xf32>
    %c0_3 = arith.constant 0 : index
    %c0_4 = arith.constant 0 : index
    %2 = vector.load %arg3[%c0_3, %c0_4] : memref<1x32xf32, #tpu.memory_space<vmem>>, vector<1x32xf32>
    %cst = arith.constant dense<0.000000e+00> : vector<16x32xf32>
    %3 = tpu.matmul %0, %1, %cst {dimension_numbers = #tpu.dot_dimension_numbers<[1], [0], [0], [1], [0, 0, 1, 1], [], []>} : vector<16x32xf32>, vector<32x32xf32>, vector<16x32xf32> -> vector<16x32xf32>
    %4 = vector.broadcast %2 : vector<1x32xf32> to vector<16x32xf32>
    %5 = arith.addf %3, %4 : vector<16x32xf32>
    %cst_5 = arith.constant 0.000000e+00 : f32
    %6 = vector.broadcast %cst_5 : f32 to vector<16x32xf32>
    %7 = arith.maximumf %5, %6 : vector<16x32xf32>
    %c0_6 = arith.constant 0 : index
    %c0_7 = arith.constant 0 : index
    %8 = vector.load %arg4[%c0_6, %c0_7] : memref<32x32xf32, #tpu.memory_space<vmem>>, vector<32x32xf32>
    %c0_8 = arith.constant 0 : index
    %c0_9 = arith.constant 0 : index
    %9 = vector.load %arg5[%c0_8, %c0_9] : memref<1x32xf32, #tpu.memory_space<vmem>>, vector<1x32xf32>
    %cst_10 = arith.constant dense<0.000000e+00> : vector<16x32xf32>
    %10 = tpu.matmul %7, %8, %cst_10 {dimension_numbers = #tpu.dot_dimension_numbers<[1], [0], [0], [1], [0, 0, 1, 1], [], []>} : vector<16x32xf32>, vector<32x32xf32>, vector<16x32xf32> -> vector<16x32xf32>
    %11 = vector.broadcast %9 : vector<1x32xf32> to vector<16x32xf32>
    %12 = arith.addf %10, %11 : vector<16x32xf32>
    %cst_11 = arith.constant 0.000000e+00 : f32
    %13 = vector.broadcast %cst_11 : f32 to vector<16x32xf32>
    %14 = arith.maximumf %12, %13 : vector<16x32xf32>
    %c0_12 = arith.constant 0 : index
    %c0_13 = arith.constant 0 : index
    %15 = vector.load %arg6[%c0_12, %c0_13] : memref<1x32xf32, #tpu.memory_space<vmem>>, vector<1x32xf32>
    %c0_14 = arith.constant 0 : index
    %c0_15 = arith.constant 0 : index
    %16 = vector.load %arg7[%c0_14, %c0_15] : memref<1x1xf32, #tpu.memory_space<vmem>>, vector<1x1xf32>
    %17 = vector.broadcast %15 : vector<1x32xf32> to vector<16x32xf32>
    %18 = arith.mulf %14, %17 : vector<16x32xf32>
    %cst_16 = arith.constant dense<0.000000e+00> : vector<16xf32>
    %19 = vector.multi_reduction <add>, %18, %cst_16 [1] : vector<16x32xf32> to vector<16xf32>
    %20 = vector.shape_cast %19 : vector<16xf32> to vector<1x16xf32>
    %21 = vector.broadcast %16 : vector<1x1xf32> to vector<1x16xf32>
    %22 = arith.addf %20, %21 : vector<1x16xf32>
    %c0_17 = arith.constant 0 : index
    %c0_18 = arith.constant 0 : index
    %23 = vector.load %arg8[%c0_17, %c0_18] : memref<1x16xf32, #tpu.memory_space<vmem>>, vector<1x16xf32>
    tpu.vector_store %arg8[%c0_17, %c0_18], %22 {strides = array<i32>} : memref<1x16xf32, #tpu.memory_space<vmem>>, vector<1x16xf32>,
    return
  }
  func.func @transform_0(%arg0: i32) -> (i32, i32) {
    %c0_i32 = arith.constant 0 : i32
    %c0_i32_0 = arith.constant 0 : i32
    return %arg0, %c0_i32 : i32, i32
  }
  func.func @transform_1(%arg0: i32) -> (i32, i32) {
    %c0_i32 = arith.constant 0 : i32
    %c0_i32_0 = arith.constant 0 : i32
    %c0_i32_1 = arith.constant 0 : i32
    return %c0_i32, %c0_i32_0 : i32, i32
  }
  func.func @transform_2(%arg0: i32) -> (i32, i32) {
    %c0_i32 = arith.constant 0 : i32
    %c0_i32_0 = arith.constant 0 : i32
    %c0_i32_1 = arith.constant 0 : i32
    return %c0_i32, %c0_i32_0 : i32, i32
  }
  func.func @transform_3(%arg0: i32) -> (i32, i32) {
    %c0_i32 = arith.constant 0 : i32
    %c0_i32_0 = arith.constant 0 : i32
    %c0_i32_1 = arith.constant 0 : i32
    return %c0_i32, %c0_i32_0 : i32, i32
  }
  func.func @transform_4(%arg0: i32) -> (i32, i32) {
    %c0_i32 = arith.constant 0 : i32
    %c0_i32_0 = arith.constant 0 : i32
    %c0_i32_1 = arith.constant 0 : i32
    return %c0_i32, %c0_i32_0 : i32, i32
  }
  func.func @transform_5(%arg0: i32) -> (i32, i32) {
    %c0_i32 = arith.constant 0 : i32
    %c0_i32_0 = arith.constant 0 : i32
    %c0_i32_1 = arith.constant 0 : i32
    return %c0_i32, %c0_i32_0 : i32, i32
  }
  func.func @transform_6(%arg0: i32) -> (i32, i32) {
    %c0_i32 = arith.constant 0 : i32
    %c0_i32_0 = arith.constant 0 : i32
    %c0_i32_1 = arith.constant 0 : i32
    return %c0_i32, %c0_i32_0 : i32, i32
  }
  func.func @transform_7(%arg0: i32) -> (i32, i32) {
    %c0_i32 = arith.constant 0 : i32
    %c0_i32_0 = arith.constant 0 : i32
    return %c0_i32, %arg0 : i32, i32
  }
}

module attributes {stable_mosaic.version = 11 : i64} {
  func.func @_mlp_kernel(%arg0: i32, %arg1: memref<16x32xf32, #tpu.memory_space<vmem>>, %arg2: memref<32x32xf32, #tpu.memory_space<vmem>>, %arg3: memref<1x32xf32, #tpu.memory_space<vmem>>, %arg4: memref<32x32xf32, #tpu.memory_space<vmem>>, %arg5: memref<1x32xf32, #tpu.memory_space<vmem>>, %arg6: memref<1x32xf32, #tpu.memory_space<vmem>>, %arg7: memref<1x1xf32, #tpu.memory_space<vmem>>, %arg8: memref<1x16xf32, #tpu.memory_space<vmem>>) attributes {dimension_semantics = [#tpu.dimension_semantics<parallel>], iteration_bounds = array<i64: 1>, scalar_prefetch = 0 : i64, scratch_operands = 0 : i64, tpu.core_type = #tpu.core_type<tc>, window_params = [{transform_indices = @transform_0, window_bounds = array<i64: 16, 32>}, {pipeline_mode = #tpu.pipeline_mode<synchronous>, transform_indices = @transform_1, window_bounds = array<i64: 32, 32>}, {pipeline_mode = #tpu.pipeline_mode<synchronous>, transform_indices = @transform_2, window_bounds = array<i64: 1, 32>}, {pipeline_mode = #tpu.pipeline_mode<synchronous>, transform_indices = @transform_3, window_bounds = array<i64: 32, 32>}, {pipeline_mode = #tpu.pipeline_mode<synchronous>, transform_indices = @transform_4, window_bounds = array<i64: 1, 32>}, {pipeline_mode = #tpu.pipeline_mode<synchronous>, transform_indices = @transform_5, window_bounds = array<i64: 1, 32>}, {pipeline_mode = #tpu.pipeline_mode<synchronous>, transform_indices = @transform_6, window_bounds = array<i64: 1, 1>}, {transform_indices = @transform_7, window_bounds = array<i64: 1, 16>}]} {
    %c0 = arith.constant 0 : index
    %c0_0 = arith.constant 0 : index
    %0 = vector.load %arg1[%c0, %c0_0] : memref<16x32xf32, #tpu.memory_space<vmem>>, vector<16x32xf32>
    %c0_1 = arith.constant 0 : index
    %c0_2 = arith.constant 0 : index
    %1 = vector.load %arg2[%c0_1, %c0_2] : memref<32x32xf32, #tpu.memory_space<vmem>>, vector<32x32xf32>
    %c0_3 = arith.constant 0 : index
    %c0_4 = arith.constant 0 : index
    %2 = vector.load %arg3[%c0_3, %c0_4] : memref<1x32xf32, #tpu.memory_space<vmem>>, vector<1x32xf32>
    %cst = arith.constant dense<0.000000e+00> : vector<16x32xf32>
    %3 = tpu.matmul %0, %1, %cst {dimension_numbers = #tpu.dot_dimension_numbers<[1], [0], [0], [1], [0, 0, 1, 1], [], []>} : vector<16x32xf32>, vector<32x32xf32>, vector<16x32xf32> -> vector<16x32xf32>
    %4 = vector.broadcast %2 : vector<1x32xf32> to vector<16x32xf32>
    %5 = arith.addf %3, %4 : vector<16x32xf32>
    %cst_5 = arith.constant 0.000000e+00 : f32
    %6 = vector.broadcast %cst_5 : f32 to vector<16x32xf32>
    %7 = arith.maximumf %5, %6 : vector<16x32xf32>
    %c0_6 = arith.constant 0 : index
    %c0_7 = arith.constant 0 : index
    %8 = vector.load %arg4[%c0_6, %c0_7] : memref<32x32xf32, #tpu.memory_space<vmem>>, vector<32x32xf32>
    %c0_8 = arith.constant 0 : index
    %c0_9 = arith.constant 0 : index
    %9 = vector.load %arg5[%c0_8, %c0_9] : memref<1x32xf32, #tpu.memory_space<vmem>>, vector<1x32xf32>
    %cst_10 = arith.constant dense<0.000000e+00> : vector<16x32xf32>
    %10 = tpu.matmul %7, %8, %cst_10 {dimension_numbers = #tpu.dot_dimension_numbers<[1], [0], [0], [1], [0, 0, 1, 1], [], []>} : vector<16x32xf32>, vector<32x32xf32>, vector<16x32xf32> -> vector<16x32xf32>
    %11 = vector.broadcast %9 : vector<1x32xf32> to vector<16x32xf32>
    %12 = arith.addf %10, %11 : vector<16x32xf32>
    %cst_11 = arith.constant 0.000000e+00 : f32
    %13 = vector.broadcast %cst_11 : f32 to vector<16x32xf32>
    %14 = arith.maximumf %12, %13 : vector<16x32xf32>
    %c0_12 = arith.constant 0 : index
    %c0_13 = arith.constant 0 : index
    %15 = vector.load %arg6[%c0_12, %c0_13] : memref<1x32xf32, #tpu.memory_space<vmem>>, vector<1x32xf32>
    %c0_14 = arith.constant 0 : index
    %c0_15 = arith.constant 0 : index
    %16 = vector.load %arg7[%c0_14, %c0_15] : memref<1x1xf32, #tpu.memory_space<vmem>>, vector<1x1xf32>
    %17 = vector.broadcast %15 : vector<1x32xf32> to vector<16x32xf32>
    %18 = arith.mulf %14, %17 : vector<16x32xf32>
    %cst_16 = arith.constant dense<0.000000e+00> : vector<16xf32>
    %19 = vector.multi_reduction <add>, %18, %cst_16 [1] : vector<16x32xf32> to vector<16xf32>
    %20 = vector.shape_cast %19 : vector<16xf32> to vector<1x16xf32>
    %21 = vector.broadcast %16 : vector<1x1xf32> to vector<1x16xf32>
    %22 = arith.addf %20, %21 : vector<1x16xf32>
    %c0_17 = arith.constant 0 : index
    %c0_18 = arith.constant 0 : index
    %23 = vector.load %arg8[%c0_17, %c0_18] : memref<1x16xf32, #tpu.memory_space<vmem>>, vector<1x16xf32>
    tpu.vector_store %arg8[%c0_17, %c0_18], %22 {strides = array<i32>} : memref<1x16xf32, #tpu.memory_space<vmem>>, vector<1x16xf32>,
    return
  }
  func.func @transform_0(%arg0: i32) -> (i32, i32) {
    %c0_i32 = arith.constant 0 : i32
    %c0_i32_0 = arith.constant 0 : i32
    return %arg0, %c0_i32 : i32, i32
  }
  func.func @transform_1(%arg0: i32) -> (i32, i32) {
    %c0_i32 = arith.constant 0 : i32
    %c0_i32_0 = arith.constant 0 : i32
    %c0_i32_1 = arith.constant 0 : i32
    return %c0_i32, %c0_i32_0 : i32, i32
  }
  func.func @transform_2(%arg0: i32) -> (i32, i32) {
    %c0_i32 = arith.constant 0 : i32
    %c0_i32_0 = arith.constant 0 : i32
    %c0_i32_1 = arith.constant 0 : i32
    return %c0_i32, %c0_i32_0 : i32, i32
  }
  func.func @transform_3(%arg0: i32) -> (i32, i32) {
    %c0_i32 = arith.constant 0 : i32
    %c0_i32_0 = arith.constant 0 : i32
    %c0_i32_1 = arith.constant 0 : i32
    return %c0_i32, %c0_i32_0 : i32, i32
  }
  func.func @transform_4(%arg0: i32) -> (i32, i32) {
    %c0_i32 = arith.constant 0 : i32
    %c0_i32_0 = arith.constant 0 : i32
    %c0_i32_1 = arith.constant 0 : i32
    return %c0_i32, %c0_i32_0 : i32, i32
  }
  func.func @transform_5(%arg0: i32) -> (i32, i32) {
    %c0_i32 = arith.constant 0 : i32
    %c0_i32_0 = arith.constant 0 : i32
    %c0_i32_1 = arith.constant 0 : i32
    return %c0_i32, %c0_i32_0 : i32, i32
  }
  func.func @transform_6(%arg0: i32) -> (i32, i32) {
    %c0_i32 = arith.constant 0 : i32
    %c0_i32_0 = arith.constant 0 : i32
    %c0_i32_1 = arith.constant 0 : i32
    return %c0_i32, %c0_i32_0 : i32, i32
  }
  func.func @transform_7(%arg0: i32) -> (i32, i32) {
    %c0_i32 = arith.constant 0 : i32
    %c0_i32_0 = arith.constant 0 : i32
    return %c0_i32, %arg0 : i32, i32
  }
}

</mosaic_0001>

<llo_original>
// kernel: tpu_custom_call.1
$region0: #{tpu_custom_call.1}
  #allocation0 [shape = 'u32[]', space=smem, size = 0x4, offset = 0x4, fixed_abs, tag = 'smem constant byte address 0x4 - core index']
  #allocation1 [shape = 'u32[144,128]{1,0:T(1,128)}', space=vmem, size = 0x12000, scoped, tag = 'internal scratch']
  #allocation2 [shape = 'f32[1,1]{1,0:T(1,128)S(1)}', space=vmem, size = 0x200, scoped, tag = 'scoped memory for tpu_custom_call.1']
  %s0 = inlined_call_operand.hbm [shape: f32[16,32], index: 0, kind: input, shape index: {}]
  %s1 = inlined_call_operand.hbm [shape: f32[32,32], index: 1, kind: input, shape index: {}]
  %s2 = inlined_call_operand.vmem [shape: f32[1,32], index: 2, kind: input, shape index: {}]
  %s3 = inlined_call_operand.hbm [shape: f32[32,32], index: 3, kind: input, shape index: {}]
  %s4 = inlined_call_operand.vmem [shape: f32[1,32], index: 4, kind: input, shape index: {}]
  %s5 = inlined_call_operand.vmem [shape: f32[1,32], index: 5, kind: input, shape index: {}]
  %s6 = inlined_call_operand.<no memory space> [shape: f32[1,1], index: 6, kind: input, shape index: {}]
  %s7 = inlined_call_operand.hbm [shape: f32[1,16], index: 7, kind: output, shape index: {}]
  %s8 = sld [smem:[#allocation0]]
  $region50: #{tpu_custom_call.1} parent=0
    _
  %s10 = ssub.s32 1, %s8
  %s11 = scalar_select 0, %s10, %s8
  %v12 = vstv %s6
  %13 = vst [vmem:[#allocation2] sm:$0x1] %v12
  $region1: #{tpu_custom_call.1} parent=0
    #allocation3 [shape = 'u8[8192]{0}', space=vmem, size = 0x2000, scoped, tag = 'input window, operand 0, single buffered']
    #allocation4 [shape = 's32[1]{0}', space=sflag, size = 0x4, scoped, tag = 'scoped memory for tpu_custom_call.1']
    #allocation5 [shape = 's32[1]{0}', space=sflag, size = 0x4, scoped, tag = 'scoped memory for tpu_custom_call.1']
    #allocation6 [shape = 'u8[16384]{0}', space=vmem, size = 0x4000, scoped, tag = 'input window, operand 1, single buffered']
    #allocation7 [shape = 's32[1]{0}', space=sflag, size = 0x4, scoped, tag = 'scoped memory for tpu_custom_call.1']
    #allocation8 [shape = 'u8[16384]{0}', space=vmem, size = 0x4000, scoped, tag = 'input window, operand 3, single buffered']
    #allocation9 [shape = 'u8[512]{0}', space=vmem, size = 0x400, scoped, tag = 'output window, operand 0, single buffered']
    %14 = vsyncpa [#allocation4], 0
    %15 = vsyncpa [#allocation7], 0
    %16 = vsyncpa [#allocation5], 0
    // Predicated region
    $region2: #{tpu_custom_call.1} parent=1 // pred_check
      _
    $region3: #{tpu_custom_call.1} parent=1 // pred_check_branch
      %18 = sbr.rel (0) target = $region5
    $region4: #{tpu_custom_call.1} parent=1 // pred_region
      %s20 = ssub.s32 256, 256
      %21 = vsyncadd [#allocation4], %s20
      %s22 = sshll.u32 [#allocation3], 4
      %s23 = int_to_ptr.vmem [resolvable:$true] %s22
      %28 = dma.hbm_to_vmem [thread:$0]  %s0, 256, %s23, [#allocation4], 128, 128, 8
    $region5: #{tpu_custom_call.1} parent=1 // pred_fallthru
      _
    // Predicated region
    $region6: #{tpu_custom_call.1} parent=1 // pred_check
      _
    $region7: #{tpu_custom_call.1} parent=1 // pred_check_branch
      %30 = sbr.rel (0) target = $region9
    $region8: #{tpu_custom_call.1} parent=1 // pred_region
      %s32 = ssub.s32 512, 512
      %33 = vsyncadd [#allocation7], %s32
      %s34 = sshll.u32 [#allocation6], 4
      %s35 = int_to_ptr.vmem [resolvable:$true] %s34
      %40 = dma.hbm_to_vmem [thread:$0]  %s1, 512, %s35, [#allocation7], 128, 128, 8
    $region9: #{tpu_custom_call.1} parent=1 // pred_fallthru
      _
    // Predicated region
    $region10: #{tpu_custom_call.1} parent=1 // pred_check
      _
    $region11: #{tpu_custom_call.1} parent=1 // pred_check_branch
      %42 = sbr.rel (0) target = $region13
    $region12: #{tpu_custom_call.1} parent=1 // pred_region
      _
    $region13: #{tpu_custom_call.1} parent=1 // pred_fallthru
      _
    // Predicated region
    $region14: #{tpu_custom_call.1} parent=1 // pred_check
      _
    $region15: #{tpu_custom_call.1} parent=1 // pred_check_branch
      %44 = sbr.rel (0) target = $region17
    $region16: #{tpu_custom_call.1} parent=1 // pred_region
      %s46 = ssub.s32 512, 512
      %47 = vsyncadd [#allocation7], %s46
      %s48 = sshll.u32 [#allocation8], 4
      %s49 = int_to_ptr.vmem [resolvable:$true] %s48
      %54 = dma.hbm_to_vmem [thread:$0]  %s3, 512, %s49, [#allocation7], 128, 128, 8
    $region17: #{tpu_custom_call.1} parent=1 // pred_fallthru
      _
    // Predicated region
    $region18: #{tpu_custom_call.1} parent=1 // pred_check
      _
    $region19: #{tpu_custom_call.1} parent=1 // pred_check_branch
      %56 = sbr.rel (0) target = $region21
    $region20: #{tpu_custom_call.1} parent=1 // pred_region
      _
    $region21: #{tpu_custom_call.1} parent=1 // pred_fallthru
      _
    // Predicated region
    $region22: #{tpu_custom_call.1} parent=1 // pred_check
      _
    $region23: #{tpu_custom_call.1} parent=1 // pred_check_branch
      %58 = sbr.rel (0) target = $region25
    $region24: #{tpu_custom_call.1} parent=1 // pred_region
      _
    $region25: #{tpu_custom_call.1} parent=1 // pred_fallthru
      _
    // Predicated region
    $region26: #{tpu_custom_call.1} parent=1 // pred_check
      _
    $region27: #{tpu_custom_call.1} parent=1 // pred_check_branch
      %60 = sbr.rel (0) target = $region29
    $region28: #{tpu_custom_call.1} parent=1 // pred_region
      _
    $region29: #{tpu_custom_call.1} parent=1 // pred_fallthru
      _
    // Predicated region
    $region30: #{tpu_custom_call.1} parent=1 // pred_check
      _
    $region31: #{tpu_custom_call.1} parent=1 // pred_check_branch
      %62 = sbr.rel (0) target = $region33
    $region32: #{tpu_custom_call.1} parent=1 // pred_region
      %63 = dma.done [#allocation4], 256
    $region33: #{tpu_custom_call.1} parent=1 // pred_fallthru
      _
    // Predicated region
    $region34: #{tpu_custom_call.1} parent=1 // pred_check
      _
    $region35: #{tpu_custom_call.1} parent=1 // pred_check_branch
      %65 = sbr.rel (0) target = $region37
    $region36: #{tpu_custom_call.1} parent=1 // pred_region
      %66 = dma.done [#allocation7], 512
    $region37: #{tpu_custom_call.1} parent=1 // pred_fallthru
      _
    // Predicated region
    $region38: #{tpu_custom_call.1} parent=1 // pred_check
      _
    $region39: #{tpu_custom_call.1} parent=1 // pred_check_branch
      %68 = sbr.rel (0) target = $region41
    $region40: #{tpu_custom_call.1} parent=1 // pred_region
      %69 = dma.done [#allocation7], 512
    $region41: #{tpu_custom_call.1} parent=1 // pred_fallthru
      _
    %v70 = vld [vmem:[#allocation3] sm:$0xff]
    %v71 = vld [vmem:[#allocation3 + $0x8] sm:$0xff]
    %v72 = vld [vmem:[#allocation6] sm:$0xff]
    %v73 = vld [vmem:[#allocation6 + $0x8] sm:$0xff]
    %v74 = vld [vmem:[#allocation6 + $0x10] sm:$0xff]
    %v75 = vld [vmem:[#allocation6 + $0x18] sm:$0xff]
    %v76 = vld [vmem:[%s2] sm:$0x1]
    %v78 = vlaneseq
    %v79 = vshrl.u32 %v78, 7
    %v80 = vsub.s32 0, %v79
    %v81 = vrot.slane %v76, %v80
    %vm83 = vcmask 261120
    %v85 = vsel %vm83, %v70, 0
    %v88 = vsel %vm83, %v71, 0
    %90 = vmatprep.subr.mxu0 0.0
    %91 = vmatpush1.msra.mxu0 0.0
    %92 = vmatprep.subr.mxu0 0.0
    %93 = vmatpush1.msra.mxu0 0.0
    %94 = vmatprep.subr.mxu0 0.0
    %95 = vmatpush1.msra.mxu0 0.0
    %96 = vmatprep.subr.mxu0 0.0
    %97 = vmatpush1.msra.mxu0 0.0
    %98 = vmatprep.subr.mxu0 0.0
    %99 = vmatpush1.msra.mxu0 0.0
    %100 = vmatprep.subr.mxu0 0.0
    %101 = vmatpush1.msra.mxu0 0.0
    %102 = vmatprep.subr.mxu0 0.0
    %103 = vmatpush1.msra.mxu0 0.0
    %104 = vmatprep.subr.mxu0 0.0
    %105 = vmatpush1.msra.mxu0 0.0
    %106 = vmatprep.subr.mxu0 0.0
    %107 = vmatpush1.msra.mxu0 0.0
    %108 = vmatprep.subr.mxu0 0.0
    %109 = vmatpush1.msra.mxu0 0.0
    %110 = vmatprep.subr.mxu0 0.0
    %111 = vmatpush1.msra.mxu0 0.0
    %112 = vmatprep.subr.mxu0 0.0
    %113 = vmatpush1.msra.mxu0 0.0
    %114 = vmatprep.subr.mxu0 0.0
    %115 = vmatpush1.msra.mxu0 %v75
    %116 = vmatprep.subr.mxu0 0.0
    %117 = vmatpush1.msra.mxu0 %v74
    %118 = vmatprep.subr.mxu0 0.0
    %119 = vmatpush1.msra.mxu0 %v73
    %120 = vmatprep.subr.mxu0 0.0
    %121 = vmatpush1.msra.mxu0 %v72
    %122 = vmatprep.subr.mxu0 0.0
    %123 = vmatpush2.msra.mxu0 0.0
    %124 = vmatprep.subr.mxu0 0.0
    %125 = vmatpush2.msra.mxu0 0.0
    %126 = vmatprep.subr.mxu0 0.0
    %127 = vmatpush2.msra.mxu0 0.0
    %128 = vmatprep.subr.mxu0 0.0
    %129 = vmatpush2.msra.mxu0 0.0
    %130 = vmatprep.subr.mxu0 0.0
    %131 = vmatpush2.msra.mxu0 0.0
    %132 = vmatprep.subr.mxu0 0.0
    %133 = vmatpush2.msra.mxu0 0.0
    %134 = vmatprep.subr.mxu0 0.0
    %135 = vmatpush2.msra.mxu0 0.0
    %136 = vmatprep.subr.mxu0 0.0
    %137 = vmatpush2.msra.mxu0 0.0
    %138 = vmatprep.subr.mxu0 0.0
    %139 = vmatpush2.msra.mxu0 0.0
    %140 = vmatprep.subr.mxu0 0.0
    %141 = vmatpush2.msra.mxu0 0.0
    %142 = vmatprep.subr.mxu0 0.0
    %143 = vmatpush2.msra.mxu0 0.0
    %144 = vmatprep.subr.mxu0 0.0
    %145 = vmatpush2.msra.mxu0 0.0
    %146 = vmatprep.subr.mxu0 0.0
    %147 = vmatpush2.msra.mxu0 0.0
    %148 = vmatprep.subr.mxu0 0.0
    %149 = vmatpush2.msra.mxu0 0.0
    %150 = vmatprep.subr.mxu0 0.0
    %151 = vmatpush2.msra.mxu0 0.0
    %152 = vmatprep.subr.mxu0 0.0
    %153 = vmatpush2.msra.mxu0 0.0
    %154 = vmatprep.mubr.f32.mxu0 0.0
    %155 = vmatmul.mubr.f32.gmra.mxu0 %v85
    %v156 = vpop.f32.mrf.mxu0
    %v157 = vadd.f32 %v81, %v156
    %v158 = vpop.f32.mrf.mxu0
    %159 = vmatprep.mubr.f32.mxu0 0.0
    %160 = vmatmul.mubr.f32.gmra.mxu0 %v88
    %v161 = vpop.f32.mrf.mxu0
    %v162 = vadd.f32 %v81, %v161
    %v163 = vpop.f32.mrf.mxu0
    %164 = vdwg.mxu0
    %v165 = vmax.f32 %v157, 0.0
    %v166 = vmax.f32 %v162, 0.0
    %v167 = vld [vmem:[#allocation8] sm:$0xff]
    %v168 = vld [vmem:[#allocation8 + $0x8] sm:$0xff]
    %v169 = vld [vmem:[#allocation8 + $0x10] sm:$0xff]
    %v170 = vld [vmem:[#allocation8 + $0x18] sm:$0xff]
    %v171 = vld [vmem:[%s4] sm:$0x1]
    %v173 = vlaneseq
    %v174 = vshrl.u32 %v173, 7
    %v175 = vsub.s32 0, %v174
    %v176 = vrot.slane %v171, %v175
    %v179 = vsel %vm83, %v165, 0
    %v182 = vsel %vm83, %v166, 0
    %184 = vmatprep.subr.mxu0 0.0
    %185 = vmatpush1.msra.mxu0 0.0
    %186 = vmatprep.subr.mxu0 0.0
    %187 = vmatpush1.msra.mxu0 0.0
    %188 = vmatprep.subr.mxu0 0.0
    %189 = vmatpush1.msra.mxu0 0.0
    %190 = vmatprep.subr.mxu0 0.0
    %191 = vmatpush1.msra.mxu0 0.0
    %192 = vmatprep.subr.mxu0 0.0
    %193 = vmatpush1.msra.mxu0 0.0
    %194 = vmatprep.subr.mxu0 0.0
    %195 = vmatpush1.msra.mxu0 0.0
    %196 = vmatprep.subr.mxu0 0.0
    %197 = vmatpush1.msra.mxu0 0.0
    %198 = vmatprep.subr.mxu0 0.0
    %199 = vmatpush1.msra.mxu0 0.0
    %200 = vmatprep.subr.mxu0 0.0
    %201 = vmatpush1.msra.mxu0 0.0
    %202 = vmatprep.subr.mxu0 0.0
    %203 = vmatpush1.msra.mxu0 0.0
    %204 = vmatprep.subr.mxu0 0.0
    %205 = vmatpush1.msra.mxu0 0.0
    %206 = vmatprep.subr.mxu0 0.0
    %207 = vmatpush1.msra.mxu0 0.0
    %208 = vmatprep.subr.mxu0 0.0
    %209 = vmatpush1.msra.mxu0 %v170
    %210 = vmatprep.subr.mxu0 0.0
    %211 = vmatpush1.msra.mxu0 %v169
    %212 = vmatprep.subr.mxu0 0.0
    %213 = vmatpush1.msra.mxu0 %v168
    %214 = vmatprep.subr.mxu0 0.0
    %215 = vmatpush1.msra.mxu0 %v167
    %216 = vmatprep.subr.mxu0 0.0
    %217 = vmatpush2.msra.mxu0 0.0
    %218 = vmatprep.subr.mxu0 0.0
    %219 = vmatpush2.msra.mxu0 0.0
    %220 = vmatprep.subr.mxu0 0.0
    %221 = vmatpush2.msra.mxu0 0.0
    %222 = vmatprep.subr.mxu0 0.0
    %223 = vmatpush2.msra.mxu0 0.0
    %224 = vmatprep.subr.mxu0 0.0
    %225 = vmatpush2.msra.mxu0 0.0
    %226 = vmatprep.subr.mxu0 0.0
    %227 = vmatpush2.msra.mxu0 0.0
    %228 = vmatprep.subr.mxu0 0.0
    %229 = vmatpush2.msra.mxu0 0.0
    %230 = vmatprep.subr.mxu0 0.0
    %231 = vmatpush2.msra.mxu0 0.0
    %232 = vmatprep.subr.mxu0 0.0
    %233 = vmatpush2.msra.mxu0 0.0
    %234 = vmatprep.subr.mxu0 0.0
    %235 = vmatpush2.msra.mxu0 0.0
    %236 = vmatprep.subr.mxu0 0.0
    %237 = vmatpush2.msra.mxu0 0.0
    %238 = vmatprep.subr.mxu0 0.0
    %239 = vmatpush2.msra.mxu0 0.0
    %240 = vmatprep.subr.mxu0 0.0
    %241 = vmatpush2.msra.mxu0 0.0
    %242 = vmatprep.subr.mxu0 0.0
    %243 = vmatpush2.msra.mxu0 0.0
    %244 = vmatprep.subr.mxu0 0.0
    %245 = vmatpush2.msra.mxu0 0.0
    %246 = vmatprep.subr.mxu0 0.0
    %247 = vmatpush2.msra.mxu0 0.0
    %248 = vmatprep.mubr.f32.mxu0 0.0
    %249 = vmatmul.mubr.f32.gmra.mxu0 %v179
    %v250 = vpop.f32.mrf.mxu0
    %v251 = vadd.f32 %v176, %v250
    %v252 = vpop.f32.mrf.mxu0
    %253 = vmatprep.mubr.f32.mxu0 0.0
    %254 = vmatmul.mubr.f32.gmra.mxu0 %v182
    %v255 = vpop.f32.mrf.mxu0
    %v256 = vadd.f32 %v176, %v255
    %v257 = vpop.f32.mrf.mxu0
    %258 = vdwg.mxu0
    %v259 = vmax.f32 %v251, 0.0
    %v260 = vmax.f32 %v256, 0.0
    %v261 = vld [vmem:[%s5] sm:$0x1]
    %v262 = vld [vmem:[#allocation2] sm:$0x1]
    %v264 = vlaneseq
    %v265 = vshrl.u32 %v264, 7
    %v266 = vsub.s32 0, %v265
    %v267 = vrot.slane %v261, %v266
    %v269 = vmul.f32 %v259, %v267
    %v270 = vmul.f32 %v260, %v267
    %v271 = vsel %vm83, %v269, 0.0
    %272 = vadd.xlane.f32.xlu0 %v271
    %v273 = vpop.xlane.xlu0 %272
    %v274 = vsel %vm83, %v270, 0.0
    %275 = vadd.xlane.f32.xlu0 %v274
    %v276 = vpop.xlane.xlu0 %275
    %278 = vset.pattern.permute.xlu0 0
    %279 = vperm.xlu0 %278, %v262
    %v280 = vpop.permute.xlu0 %279
    %v282 = vlaneseq
    %v283 = vshrl.u32 %v282, 7
    %v284 = vsub.s32 0, %v283
    %v285 = vrot.slane %v280, %v284
    %v286 = vadd.f32 %v273, %v285
    %v287 = vadd.f32 %v276, %v285
    %v290 = vlaneseq
    %v291 = vand.u32 %v290, 127
    %v292 = vlaneseq
    %v293 = vshrl.u32 %v292, 7
    %v294 = vsub.s32 %v291, %v293
    %v295 = vrot.slane %v286, %v294
    %v296 = vadd.s32 %v291, 4294967288
    %v297 = vlaneseq
    %v298 = vshrl.u32 %v297, 7
    %v299 = vsub.s32 %v296, %v298
    %v300 = vrot.slane %v287, %v299
    %vm301 = vcmask 130112
    %v302 = vsel %vm301, %v300, %v295
    %vm304 = vcmask 122880
    %305 = vst.msk [vmem:[#allocation9] sm:$0x1] %vm304, %v302
    // Predicated region
    $region42: #{tpu_custom_call.1} parent=1 // pred_check
      _
    $region43: #{tpu_custom_call.1} parent=1 // pred_check_branch
      %307 = sbr.rel (0) target = $region45
    $region44: #{tpu_custom_call.1} parent=1 // pred_region
      %s309 = ssub.s32 16, 16
      %310 = vsyncadd [#allocation5], %s309
      %s312 = sshll.u32 [#allocation9], 4
      %s313 = int_to_ptr.vmem [resolvable:$true] %s312
      %315 = dma.vmem_to_hbm [thread:$0]  %s313, 16, %s7, [#allocation5]
    $region45: #{tpu_custom_call.1} parent=1 // pred_fallthru
      _
    // Predicated region
    $region46: #{tpu_custom_call.1} parent=1 // pred_check
      _
    $region47: #{tpu_custom_call.1} parent=1 // pred_check_branch
      %317 = sbr.rel (0) target = $region49
    $region48: #{tpu_custom_call.1} parent=1 // pred_region
      %318 = dma.done [#allocation5], 16
    $region49: #{tpu_custom_call.1} parent=1 // pred_fallthru
      _
    %319 = vsyncpa [#allocation4], 1
    %320 = vsyncpa [#allocation7], 1
    %321 = vsyncpa [#allocation5], 1

// kernel: tpu_custom_call.1
$region0: #{tpu_custom_call.1}
  #allocation0 [shape = 'u32[]', space=smem, size = 0x4, offset = 0x4, fixed_abs, tag = 'smem constant byte address 0x4 - core index']
  #allocation1 [shape = 'u32[144,128]{1,0:T(1,128)}', space=vmem, size = 0x12000, scoped, tag = 'internal scratch']
  #allocation2 [shape = 'f32[1,1]{1,0:T(1,128)S(1)}', space=vmem, size = 0x200, scoped, tag = 'scoped memory for tpu_custom_call.1']
  %s0 = inlined_call_operand.hbm [shape: f32[16,32], index: 0, kind: input, shape index: {}]
  %s1 = inlined_call_operand.hbm [shape: f32[32,32], index: 1, kind: input, shape index: {}]
  %s2 = inlined_call_operand.vmem [shape: f32[1,32], index: 2, kind: input, shape index: {}]
  %s3 = inlined_call_operand.hbm [shape: f32[32,32], index: 3, kind: input, shape index: {}]
  %s4 = inlined_call_operand.vmem [shape: f32[1,32], index: 4, kind: input, shape index: {}]
  %s5 = inlined_call_operand.vmem [shape: f32[1,32], index: 5, kind: input, shape index: {}]
  %s6 = inlined_call_operand.<no memory space> [shape: f32[1,1], index: 6, kind: input, shape index: {}]
  %s7 = inlined_call_operand.hbm [shape: f32[1,16], index: 7, kind: output, shape index: {}]
  %s8 = sld [smem:[#allocation0]]
  $region50: #{tpu_custom_call.1} parent=0
    _
  %s10 = ssub.s32 1, %s8
  %s11 = scalar_select 0, %s10, %s8
  %v12 = vstv %s6
  %13 = vst [vmem:[#allocation2] sm:$0x1] %v12
  $region1: #{tpu_custom_call.1} parent=0
    #allocation3 [shape = 'u8[8192]{0}', space=vmem, size = 0x2000, scoped, tag = 'input window, operand 0, single buffered']
    #allocation4 [shape = 's32[1]{0}', space=sflag, size = 0x4, scoped, tag = 'scoped memory for tpu_custom_call.1']
    #allocation5 [shape = 's32[1]{0}', space=sflag, size = 0x4, scoped, tag = 'scoped memory for tpu_custom_call.1']
    #allocation6 [shape = 'u8[16384]{0}', space=vmem, size = 0x4000, scoped, tag = 'input window, operand 1, single buffered']
    #allocation7 [shape = 's32[1]{0}', space=sflag, size = 0x4, scoped, tag = 'scoped memory for tpu_custom_call.1']
    #allocation8 [shape = 'u8[16384]{0}', space=vmem, size = 0x4000, scoped, tag = 'input window, operand 3, single buffered']
    #allocation9 [shape = 'u8[512]{0}', space=vmem, size = 0x400, scoped, tag = 'output window, operand 0, single buffered']
    %14 = vsyncpa [#allocation4], 0
    %15 = vsyncpa [#allocation7], 0
    %16 = vsyncpa [#allocation5], 0
    // Predicated region
    $region2: #{tpu_custom_call.1} parent=1 // pred_check
      _
    $region3: #{tpu_custom_call.1} parent=1 // pred_check_branch
      %18 = sbr.rel (0) target = $region5
    $region4: #{tpu_custom_call.1} parent=1 // pred_region
      %s20 = ssub.s32 256, 256
      %21 = vsyncadd [#allocation4], %s20
      %s22 = sshll.u32 [#allocation3], 4
      %s23 = int_to_ptr.vmem [resolvable:$true] %s22
      %28 = dma.hbm_to_vmem [thread:$0]  %s0, 256, %s23, [#allocation4], 128, 128, 8
    $region5: #{tpu_custom_call.1} parent=1 // pred_fallthru
      _
    // Predicated region
    $region6: #{tpu_custom_call.1} parent=1 // pred_check
      _
    $region7: #{tpu_custom_call.1} parent=1 // pred_check_branch
      %30 = sbr.rel (0) target = $region9
    $region8: #{tpu_custom_call.1} parent=1 // pred_region
      %s32 = ssub.s32 512, 512
      %33 = vsyncadd [#allocation7], %s32
      %s34 = sshll.u32 [#allocation6], 4
      %s35 = int_to_ptr.vmem [resolvable:$true] %s34
      %40 = dma.hbm_to_vmem [thread:$0]  %s1, 512, %s35, [#allocation7], 128, 128, 8
    $region9: #{tpu_custom_call.1} parent=1 // pred_fallthru
      _
    // Predicated region
    $region10: #{tpu_custom_call.1} parent=1 // pred_check
      _
    $region11: #{tpu_custom_call.1} parent=1 // pred_check_branch
      %42 = sbr.rel (0) target = $region13
    $region12: #{tpu_custom_call.1} parent=1 // pred_region
      _
    $region13: #{tpu_custom_call.1} parent=1 // pred_fallthru
      _
    // Predicated region
    $region14: #{tpu_custom_call.1} parent=1 // pred_check
      _
    $region15: #{tpu_custom_call.1} parent=1 // pred_check_branch
      %44 = sbr.rel (0) target = $region17
    $region16: #{tpu_custom_call.1} parent=1 // pred_region
      %s46 = ssub.s32 512, 512
      %47 = vsyncadd [#allocation7], %s46
      %s48 = sshll.u32 [#allocation8], 4
      %s49 = int_to_ptr.vmem [resolvable:$true] %s48
      %54 = dma.hbm_to_vmem [thread:$0]  %s3, 512, %s49, [#allocation7], 128, 128, 8
    $region17: #{tpu_custom_call.1} parent=1 // pred_fallthru
      _
    // Predicated region
    $region18: #{tpu_custom_call.1} parent=1 // pred_check
      _
    $region19: #{tpu_custom_call.1} parent=1 // pred_check_branch
      %56 = sbr.rel (0) target = $region21
    $region20: #{tpu_custom_call.1} parent=1 // pred_region
      _
    $region21: #{tpu_custom_call.1} parent=1 // pred_fallthru
      _
    // Predicated region
    $region22: #{tpu_custom_call.1} parent=1 // pred_check
      _
    $region23: #{tpu_custom_call.1} parent=1 // pred_check_branch
      %58 = sbr.rel (0) target = $region25
    $region24: #{tpu_custom_call.1} parent=1 // pred_region
      _
    $region25: #{tpu_custom_call.1} parent=1 // pred_fallthru
      _
    // Predicated region
    $region26: #{tpu_custom_call.1} parent=1 // pred_check
      _
    $region27: #{tpu_custom_call.1} parent=1 // pred_check_branch
      %60 = sbr.rel (0) target = $region29
    $region28: #{tpu_custom_call.1} parent=1 // pred_region
      _
    $region29: #{tpu_custom_call.1} parent=1 // pred_fallthru
      _
    // Predicated region
    $region30: #{tpu_custom_call.1} parent=1 // pred_check
      _
    $region31: #{tpu_custom_call.1} parent=1 // pred_check_branch
      %62 = sbr.rel (0) target = $region33
    $region32: #{tpu_custom_call.1} parent=1 // pred_region
      %63 = dma.done [#allocation4], 256
    $region33: #{tpu_custom_call.1} parent=1 // pred_fallthru
      _
    // Predicated region
    $region34: #{tpu_custom_call.1} parent=1 // pred_check
      _
    $region35: #{tpu_custom_call.1} parent=1 // pred_check_branch
      %65 = sbr.rel (0) target = $region37
    $region36: #{tpu_custom_call.1} parent=1 // pred_region
      %66 = dma.done [#allocation7], 512
    $region37: #{tpu_custom_call.1} parent=1 // pred_fallthru
      _
    // Predicated region
    $region38: #{tpu_custom_call.1} parent=1 // pred_check
      _
    $region39: #{tpu_custom_call.1} parent=1 // pred_check_branch
      %68 = sbr.rel (0) target = $region41
    $region40: #{tpu_custom_call.1} parent=1 // pred_region
      %69 = dma.done [#allocation7], 512
    $region41: #{tpu_custom_call.1} parent=1 // pred_fallthru
      _
    %v70 = vld [vmem:[#allocation3] sm:$0xff]
    %v71 = vld [vmem:[#allocation3 + $0x8] sm:$0xff]
    %v72 = vld [vmem:[#allocation6] sm:$0xff]
    %v73 = vld [vmem:[#allocation6 + $0x8] sm:$0xff]
    %v74 = vld [vmem:[#allocation6 + $0x10] sm:$0xff]
    %v75 = vld [vmem:[#allocation6 + $0x18] sm:$0xff]
    %v76 = vld [vmem:[%s2] sm:$0x1]
    %v78 = vlaneseq
    %v79 = vshrl.u32 %v78, 7
    %v80 = vsub.s32 0, %v79
    %v81 = vrot.slane %v76, %v80
    %vm83 = vcmask 261120
    %v85 = vsel %vm83, %v70, 0
    %v88 = vsel %vm83, %v71, 0
    %90 = vmatprep.subr.mxu0 0.0
    %91 = vmatpush1.msra.mxu0 0.0
    %92 = vmatprep.subr.mxu0 0.0
    %93 = vmatpush1.msra.mxu0 0.0
    %94 = vmatprep.subr.mxu0 0.0
    %95 = vmatpush1.msra.mxu0 0.0
    %96 = vmatprep.subr.mxu0 0.0
    %97 = vmatpush1.msra.mxu0 0.0
    %98 = vmatprep.subr.mxu0 0.0
    %99 = vmatpush1.msra.mxu0 0.0
    %100 = vmatprep.subr.mxu0 0.0
    %101 = vmatpush1.msra.mxu0 0.0
    %102 = vmatprep.subr.mxu0 0.0
    %103 = vmatpush1.msra.mxu0 0.0
    %104 = vmatprep.subr.mxu0 0.0
    %105 = vmatpush1.msra.mxu0 0.0
    %106 = vmatprep.subr.mxu0 0.0
    %107 = vmatpush1.msra.mxu0 0.0
    %108 = vmatprep.subr.mxu0 0.0
    %109 = vmatpush1.msra.mxu0 0.0
    %110 = vmatprep.subr.mxu0 0.0
    %111 = vmatpush1.msra.mxu0 0.0
    %112 = vmatprep.subr.mxu0 0.0
    %113 = vmatpush1.msra.mxu0 0.0
    %114 = vmatprep.subr.mxu0 0.0
    %115 = vmatpush1.msra.mxu0 %v75
    %116 = vmatprep.subr.mxu0 0.0
    %117 = vmatpush1.msra.mxu0 %v74
    %118 = vmatprep.subr.mxu0 0.0
    %119 = vmatpush1.msra.mxu0 %v73
    %120 = vmatprep.subr.mxu0 0.0
    %121 = vmatpush1.msra.mxu0 %v72
    %122 = vmatprep.subr.mxu0 0.0
    %123 = vmatpush2.msra.mxu0 0.0
    %124 = vmatprep.subr.mxu0 0.0
    %125 = vmatpush2.msra.mxu0 0.0
    %126 = vmatprep.subr.mxu0 0.0
    %127 = vmatpush2.msra.mxu0 0.0
    %128 = vmatprep.subr.mxu0 0.0
    %129 = vmatpush2.msra.mxu0 0.0
    %130 = vmatprep.subr.mxu0 0.0
    %131 = vmatpush2.msra.mxu0 0.0
    %132 = vmatprep.subr.mxu0 0.0
    %133 = vmatpush2.msra.mxu0 0.0
    %134 = vmatprep.subr.mxu0 0.0
    %135 = vmatpush2.msra.mxu0 0.0
    %136 = vmatprep.subr.mxu0 0.0
    %137 = vmatpush2.msra.mxu0 0.0
    %138 = vmatprep.subr.mxu0 0.0
    %139 = vmatpush2.msra.mxu0 0.0
    %140 = vmatprep.subr.mxu0 0.0
    %141 = vmatpush2.msra.mxu0 0.0
    %142 = vmatprep.subr.mxu0 0.0
    %143 = vmatpush2.msra.mxu0 0.0
    %144 = vmatprep.subr.mxu0 0.0
    %145 = vmatpush2.msra.mxu0 0.0
    %146 = vmatprep.subr.mxu0 0.0
    %147 = vmatpush2.msra.mxu0 0.0
    %148 = vmatprep.subr.mxu0 0.0
    %149 = vmatpush2.msra.mxu0 0.0
    %150 = vmatprep.subr.mxu0 0.0
    %151 = vmatpush2.msra.mxu0 0.0
    %152 = vmatprep.subr.mxu0 0.0
    %153 = vmatpush2.msra.mxu0 0.0
    %154 = vmatprep.mubr.f32.mxu0 0.0
    %155 = vmatmul.mubr.f32.gmra.mxu0 %v85
    %v156 = vpop.f32.mrf.mxu0
    %v157 = vadd.f32 %v81, %v156
    %v158 = vpop.f32.mrf.mxu0
    %159 = vmatprep.mubr.f32.mxu0 0.0
    %160 = vmatmul.mubr.f32.gmra.mxu0 %v88
    %v161 = vpop.f32.mrf.mxu0
    %v162 = vadd.f32 %v81, %v161
    %v163 = vpop.f32.mrf.mxu0
    %164 = vdwg.mxu0
    %v165 = vmax.f32 %v157, 0.0
    %v166 = vmax.f32 %v162, 0.0
    %v167 = vld [vmem:[#allocation8] sm:$0xff]
    %v168 = vld [vmem:[#allocation8 + $0x8] sm:$0xff]
    %v169 = vld [vmem:[#allocation8 + $0x10] sm:$0xff]
    %v170 = vld [vmem:[#allocation8 + $0x18] sm:$0xff]
    %v171 = vld [vmem:[%s4] sm:$0x1]
    %v173 = vlaneseq
    %v174 = vshrl.u32 %v173, 7
    %v175 = vsub.s32 0, %v174
    %v176 = vrot.slane %v171, %v175
    %v179 = vsel %vm83, %v165, 0
    %v182 = vsel %vm83, %v166, 0
    %184 = vmatprep.subr.mxu0 0.0
    %185 = vmatpush1.msra.mxu0 0.0
    %186 = vmatprep.subr.mxu0 0.0
    %187 = vmatpush1.msra.mxu0 0.0
    %188 = vmatprep.subr.mxu0 0.0
    %189 = vmatpush1.msra.mxu0 0.0
    %190 = vmatprep.subr.mxu0 0.0
    %191 = vmatpush1.msra.mxu0 0.0
    %192 = vmatprep.subr.mxu0 0.0
    %193 = vmatpush1.msra.mxu0 0.0
    %194 = vmatprep.subr.mxu0 0.0
    %195 = vmatpush1.msra.mxu0 0.0
    %196 = vmatprep.subr.mxu0 0.0
    %197 = vmatpush1.msra.mxu0 0.0
    %198 = vmatprep.subr.mxu0 0.0
    %199 = vmatpush1.msra.mxu0 0.0
    %200 = vmatprep.subr.mxu0 0.0
    %201 = vmatpush1.msra.mxu0 0.0
    %202 = vmatprep.subr.mxu0 0.0
    %203 = vmatpush1.msra.mxu0 0.0
    %204 = vmatprep.subr.mxu0 0.0
    %205 = vmatpush1.msra.mxu0 0.0
    %206 = vmatprep.subr.mxu0 0.0
    %207 = vmatpush1.msra.mxu0 0.0
    %208 = vmatprep.subr.mxu0 0.0
    %209 = vmatpush1.msra.mxu0 %v170
    %210 = vmatprep.subr.mxu0 0.0
    %211 = vmatpush1.msra.mxu0 %v169
    %212 = vmatprep.subr.mxu0 0.0
    %213 = vmatpush1.msra.mxu0 %v168
    %214 = vmatprep.subr.mxu0 0.0
    %215 = vmatpush1.msra.mxu0 %v167
    %216 = vmatprep.subr.mxu0 0.0
    %217 = vmatpush2.msra.mxu0 0.0
    %218 = vmatprep.subr.mxu0 0.0
    %219 = vmatpush2.msra.mxu0 0.0
    %220 = vmatprep.subr.mxu0 0.0
    %221 = vmatpush2.msra.mxu0 0.0
    %222 = vmatprep.subr.mxu0 0.0
    %223 = vmatpush2.msra.mxu0 0.0
    %224 = vmatprep.subr.mxu0 0.0
    %225 = vmatpush2.msra.mxu0 0.0
    %226 = vmatprep.subr.mxu0 0.0
    %227 = vmatpush2.msra.mxu0 0.0
    %228 = vmatprep.subr.mxu0 0.0
    %229 = vmatpush2.msra.mxu0 0.0
    %230 = vmatprep.subr.mxu0 0.0
    %231 = vmatpush2.msra.mxu0 0.0
    %232 = vmatprep.subr.mxu0 0.0
    %233 = vmatpush2.msra.mxu0 0.0
    %234 = vmatprep.subr.mxu0 0.0
    %235 = vmatpush2.msra.mxu0 0.0
    %236 = vmatprep.subr.mxu0 0.0
    %237 = vmatpush2.msra.mxu0 0.0
    %238 = vmatprep.subr.mxu0 0.0
    %239 = vmatpush2.msra.mxu0 0.0
    %240 = vmatprep.subr.mxu0 0.0
    %241 = vmatpush2.msra.mxu0 0.0
    %242 = vmatprep.subr.mxu0 0.0
    %243 = vmatpush2.msra.mxu0 0.0
    %244 = vmatprep.subr.mxu0 0.0
    %245 = vmatpush2.msra.mxu0 0.0
    %246 = vmatprep.subr.mxu0 0.0
    %247 = vmatpush2.msra.mxu0 0.0
    %248 = vmatprep.mubr.f32.mxu0 0.0
    %249 = vmatmul.mubr.f32.gmra.mxu0 %v179
    %v250 = vpop.f32.mrf.mxu0
    %v251 = vadd.f32 %v176, %v250
    %v252 = vpop.f32.mrf.mxu0
    %253 = vmatprep.mubr.f32.mxu0 0.0
    %254 = vmatmul.mubr.f32.gmra.mxu0 %v182
    %v255 = vpop.f32.mrf.mxu0
    %v256 = vadd.f32 %v176, %v255
    %v257 = vpop.f32.mrf.mxu0
    %258 = vdwg.mxu0
    %v259 = vmax.f32 %v251, 0.0
    %v260 = vmax.f32 %v256, 0.0
    %v261 = vld [vmem:[%s5] sm:$0x1]
    %v262 = vld [vmem:[#allocation2] sm:$0x1]
    %v264 = vlaneseq
    %v265 = vshrl.u32 %v264, 7
    %v266 = vsub.s32 0, %v265
    %v267 = vrot.slane %v261, %v266
    %v269 = vmul.f32 %v259, %v267
    %v270 = vmul.f32 %v260, %v267
    %v271 = vsel %vm83, %v269, 0.0
    %272 = vadd.xlane.f32.xlu0 %v271
    %v273 = vpop.xlane.xlu0 %272
    %v274 = vsel %vm83, %v270, 0.0
    %275 = vadd.xlane.f32.xlu0 %v274
    %v276 = vpop.xlane.xlu0 %275
    %278 = vset.pattern.permute.xlu0 0
    %279 = vperm.xlu0 %278, %v262
    %v280 = vpop.permute.xlu0 %279
    %v282 = vlaneseq
    %v283 = vshrl.u32 %v282, 7
    %v284 = vsub.s32 0, %v283
    %v285 = vrot.slane %v280, %v284
    %v286 = vadd.f32 %v273, %v285
    %v287 = vadd.f32 %v276, %v285
    %v290 = vlaneseq
    %v291 = vand.u32 %v290, 127
    %v292 = vlaneseq
    %v293 = vshrl.u32 %v292, 7
    %v294 = vsub.s32 %v291, %v293
    %v295 = vrot.slane %v286, %v294
    %v296 = vadd.s32 %v291, 4294967288
    %v297 = vlaneseq
    %v298 = vshrl.u32 %v297, 7
    %v299 = vsub.s32 %v296, %v298
    %v300 = vrot.slane %v287, %v299
    %vm301 = vcmask 130112
    %v302 = vsel %vm301, %v300, %v295
    %vm304 = vcmask 122880
    %305 = vst.msk [vmem:[#allocation9] sm:$0x1] %vm304, %v302
    // Predicated region
    $region42: #{tpu_custom_call.1} parent=1 // pred_check
      _
    $region43: #{tpu_custom_call.1} parent=1 // pred_check_branch
      %307 = sbr.rel (0) target = $region45
    $region44: #{tpu_custom_call.1} parent=1 // pred_region
      %s309 = ssub.s32 16, 16
      %310 = vsyncadd [#allocation5], %s309
      %s312 = sshll.u32 [#allocation9], 4
      %s313 = int_to_ptr.vmem [resolvable:$true] %s312
      %315 = dma.vmem_to_hbm [thread:$0]  %s313, 16, %s7, [#allocation5]
    $region45: #{tpu_custom_call.1} parent=1 // pred_fallthru
      _
    // Predicated region
    $region46: #{tpu_custom_call.1} parent=1 // pred_check
      _
    $region47: #{tpu_custom_call.1} parent=1 // pred_check_branch
      %317 = sbr.rel (0) target = $region49
    $region48: #{tpu_custom_call.1} parent=1 // pred_region
      %318 = dma.done [#allocation5], 16
    $region49: #{tpu_custom_call.1} parent=1 // pred_fallthru
      _
    %319 = vsyncpa [#allocation4], 1
    %320 = vsyncpa [#allocation7], 1
    %321 = vsyncpa [#allocation5], 1

</llo_original>
